<compile_context>
chip_gen: v5e
topology: v5e:2x2
jax: 0.10.0
libtpu: 0.0.40
codegen_flags: <defaults>
</compile_context>

<pallas_src>
import functools
import numpy as np
import jax
import jax.numpy as jnp
from jax.experimental import pallas as pl
from jax.experimental.pallas import tpu as pltpu


def _round_up(x, m):
    return (x + m - 1) // m * m


def _choose_batch_tile(batch, target=8):
    """Largest divisor of `batch` <= target, keeping >=2 grid steps when batch >= 2
    (v7x has 2 TensorCores that shard a 'parallel' grid axis)."""
    cap = max(1, min(target, batch // 2)) if batch >= 2 else 1
    for bt in range(cap, 0, -1):
        if batch % bt == 0:
            return bt
    return 1


# ---------------------------------------------------------------------------
# Pallas kernel: one grid step == one batch tile of Bt rows.
# ---------------------------------------------------------------------------
def _bilinear_kernel(e_ref, d_ref, w_e_ref, b_e_ref, w_d_ref, b_d_ref, u_ref,
                     out_ref, diag_ref, *, hidden, num_labels):
    # e_ref:  (Bt, Le, E)  bf16      d_ref:  (Bt, Ld, Dd) bf16
    # w_e_ref:(Hp, E)      bf16      b_e_ref:(Hp, 1)      f32
    # w_d_ref:(Dd, Hp)     bf16      b_d_ref:(1, Hp)      f32
    # u_ref:  (Hp, Lc)     bf16  with u_ref[h1, l*H + h2] == U[l, h1, h2]
    # out_ref:(Bt, Ld, Lo) f32   with out[bi, i, l*Le + j] == score(b, l, i, j)
    # diag_ref: (Lc, Lo)   f32   scratch holding I_L (kron) e_projT_b per row
    bt, le, _ = e_ref.shape
    _, ld, _ = d_ref.shape
    h = hidden

    # stack the batch tile into the MXU M dimension
    e2 = e_ref[...].reshape(bt * le, e_ref.shape[2])        # (Bt*Le, E)  bf16
    d2 = d_ref[...].reshape(bt * ld, d_ref.shape[2])        # (Bt*Ld, Dd) bf16

    # decoder projection (bf16 MXU, f32 accumulate + f32 bias)
    d_proj = jnp.dot(d2, w_d_ref[...],
                     preferred_element_type=jnp.float32) + b_d_ref[...]   # (Bt*Ld, Hp)

    # encoder projection computed directly transposed: (Hp, Bt*Le)
    e_projT = jax.lax.dot_general(
        w_e_ref[...], e2, dimension_numbers=(((1,), (1,)), ((), ())),
        preferred_element_type=jnp.float32) + b_e_ref[...]                # (Hp, Bt*Le)

    # one wide, densely-packed label contraction over the whole batch tile
    du_all = jnp.dot(d_proj.astype(jnp.bfloat16), u_ref[...],
                     preferred_element_type=jnp.float32)                  # (Bt*Ld, Lc)

    # block-diagonal scratch: off-diagonal blocks stay zero, diagonal blocks are
    # overwritten per batch row (zero unconditionally -- scratch is per-core).
    diag_ref[...] = jnp.zeros_like(diag_ref)

    for bi in range(bt):                                    # static unroll, Bt small
        ept_b = e_projT[:h, bi * le:(bi + 1) * le]          # (H, Le) f32
        for l in range(num_labels):                         # tiny sub-tile stores
            diag_ref[l * h:(l + 1) * h, l * le:(l + 1) * le] = ept_b
        du_b = du_all[bi * ld:(bi + 1) * ld, :].astype(jnp.bfloat16)      # (Ld, Lc)
        scores = jnp.dot(du_b, diag_ref[...].astype(jnp.bfloat16),
                         preferred_element_type=jnp.float32)              # (Ld, Lo)
        out_ref[bi, :, :] = scores


# ---------------------------------------------------------------------------
# One-time parameter packing (hoisted out of the per-call forward path).
# ---------------------------------------------------------------------------
def prepare_bilinear_params(params):
    w_e = jnp.asarray(params["w_e"], jnp.float32)           # (H, E)
    b_e = jnp.asarray(params["b_e"], jnp.float32)           # (H,)
    w_d = jnp.asarray(params["w_d"], jnp.float32)           # (H, Dd)
    b_d = jnp.asarray(params["b_d"], jnp.float32)           # (H,)
    U = jnp.asarray(params["U"], jnp.float32)                # (L, H, H)
    H, E = w_e.shape
    Dd = w_d.shape[1]
    L = U.shape[0]
    Hp = _round_up(H, 128)                                   # lane-dense hidden dim
    Lc = _round_up(L * H, 128)                               # densely packed label cols

    we_he = jnp.zeros((Hp, E), jnp.bfloat16).at[:H, :].set(w_e.astype(jnp.bfloat16))
    wd_t = jnp.zeros((Dd, Hp), jnp.bfloat16).at[:, :H].set(w_d.T.astype(jnp.bfloat16))
    be_col = jnp.zeros((Hp, 1), jnp.float32).at[:H, 0].set(b_e)
    bd_row = jnp.zeros((1, Hp), jnp.float32).at[0, :H].set(b_d)
    u_pack = jnp.zeros((Hp, Lc), jnp.bfloat16).at[:H, :L * H].set(
        jnp.transpose(U, (1, 0, 2)).reshape(H, L * H).astype(jnp.bfloat16))

    return {"w_e": we_he, "b_e": be_col, "w_d": wd_t, "b_d": bd_row, "u": u_pack,
            "H": H, "E": E, "Dd": Dd, "L": L, "Hp": Hp, "Lc": Lc}


# ---------------------------------------------------------------------------
# Forward wrapper (mirrors the PyTorch module semantics).
# ---------------------------------------------------------------------------
def bilinear_attention_forward(e_outputs, d_outputs, prep, *, batch_tile=8):
    """e_outputs: (B, Le, encoder_size), d_outputs: (B, Ld, decoder_size)."""
    B, Le, E = e_outputs.shape
    _, Ld, Dd = d_outputs.shape
    H, L, Hp, Lc = prep["H"], prep["L"], prep["Hp"], prep["Lc"]
    Lo = _round_up(L * Le, 128)                              # lane-dense output width

    bt = _choose_batch_tile(B, batch_tile)
    grid = (B // bt,)

    e_bf = jnp.asarray(e_outputs, jnp.float32).astype(jnp.bfloat16)
    d_bf = jnp.asarray(d_outputs, jnp.float32).astype(jnp.bfloat16)

    kernel = functools.partial(_bilinear_kernel, hidden=H, num_labels=L)

    grid_spec = pltpu.PrefetchScalarGridSpec(
        num_scalar_prefetch=0,
        grid=grid,
        in_specs=[
            pl.BlockSpec((bt, Le, E),  lambda b: (b, 0, 0)),   # e_outputs (bf16)
            pl.BlockSpec((bt, Ld, Dd), lambda b: (b, 0, 0)),   # d_outputs (bf16)
            pl.BlockSpec((Hp, E),      lambda b: (0, 0)),      # W_e padded (bf16)
            pl.BlockSpec((Hp, 1),      lambda b: (0, 0)),      # b_e as a column (f32)
            pl.BlockSpec((Dd, Hp),     lambda b: (0, 0)),      # W_d^T padded (bf16)
            pl.BlockSpec((1, Hp),      lambda b: (0, 0)),      # b_d as a row (f32)
            pl.BlockSpec((Hp, Lc),     lambda b: (0, 0)),      # U densely packed (bf16)
        ],
        out_specs=pl.BlockSpec((bt, Ld, Lo), lambda b: (b, 0, 0)),
        scratch_shapes=[pltpu.VMEM((Lc, Lo), jnp.float32)],    # block-diagonal RHS
    )

    out = pl.pallas_call(
        kernel,
        out_shape=jax.ShapeDtypeStruct((B, Ld, Lo), jnp.float32),
        grid_spec=grid_spec,
        compiler_params=pltpu.CompilerParams(
            dimension_semantics=("parallel",)),  # batch tiles independent (2 TCs on v7x)
    )(e_bf, d_bf, prep["w_e"], prep["b_e"], prep["w_d"], prep["b_d"], prep["u"])

    # out[b, i, l*Le + j] -> PyTorch layout (B, Ld, Le, L)
    out = out[:, :, :L * Le].reshape(B, Ld, L, Le)
    return jnp.transpose(out, (0, 1, 3, 2))


# ---------------------------------------------------------------------------
# Parameter init (same shapes as the PyTorch module).
# ---------------------------------------------------------------------------
def make_params(key, encoder_size, decoder_size, num_labels, hidden_size):
    k1, k2, k3, k4, k5 = jax.random.split(key, 5)
    be_bound = 1.0 / np.sqrt(encoder_size)
    bd_bound = 1.0 / np.sqrt(decoder_size)
    xavier_std = np.sqrt(2.0 / (hidden_size + hidden_size))
    return {
        "w_e": jax.random.uniform(k1, (hidden_size, encoder_size),
                                  jnp.float32, -be_bound, be_bound),
        "b_e": jax.random.uniform(k2, (hidden_size,), jnp.float32, -be_bound, be_bound),
        "w_d": jax.random.uniform(k3, (hidden_size, decoder_size),
                                  jnp.float32, -bd_bound, bd_bound),
        "b_d": jax.random.uniform(k4, (hidden_size,), jnp.float32, -bd_bound, bd_bound),
        "U": xavier_std * jax.random.normal(
            k5, (num_labels, hidden_size, hidden_size), jnp.float32),
    }


# ---------------------------------------------------------------------------
# Numpy reference (same math as the PyTorch forward).  Operands are rounded to
# bf16 exactly like the kernel's MXU inputs so the comparison checks kernel
# structure/layout rather than bf16 quantization; accumulation stays f64.
# ---------------------------------------------------------------------------
def _ref_bilinear_attention(e_outputs, d_outputs, params):
    def bf(x):
        x = jnp.asarray(x, jnp.float32).astype(jnp.bfloat16).astype(jnp.float32)
        return np.asarray(x, np.float64)

    e = bf(e_outputs)
    d = bf(d_outputs)
    w_e = bf(params["w_e"]); w_d = bf(params["w_d"]); U = bf(params["U"])
    b_e = np.asarray(params["b_e"], np.float64)
    b_d = np.asarray(params["b_d"], np.float64)

    ep = e @ w_e.T + b_e                                   # (B, Le, H)
    dp = d @ w_d.T + b_d                                   # (B, Ld, H)
    out_u = np.einsum('bih,lhk->blik', dp, U)              # d.unsqueeze(1) @ U
    out = np.einsum('blik,bjk->blij', out_u, ep)           # @ e.unsqueeze(1).transpose(2,3)
    return np.transpose(out, (0, 2, 3, 1))                 # permute(0, 2, 3, 1)


if __name__ == "__main__":
    B, split_num = 2, 6
    Ld, Le = split_num, split_num + 2            # length_decoder, length_encoder
    E, Dd, H, L = 24, 16, 32, 4                  # encoder/decoder/hidden sizes, num_labels

    key = jax.random.PRNGKey(0)
    ke, kd, kp = jax.random.split(key, 3)
    e_outputs = jax.random.normal(ke, (B, Le, E), jnp.float32)
    d_outputs = jax.random.normal(kd, (B, Ld, Dd), jnp.float32)
    params = make_params(kp, E, Dd, L, H)
    prep = prepare_bilinear_params(params)       # hoisted out of the forward path

    out = bilinear_attention_forward(e_outputs, d_outputs, prep)
    out = jax.block_until_ready(out)

    ref = _ref_bilinear_attention(e_outputs, d_outputs, params)
    assert out.shape == ref.shape == (B, Ld, Le, L)
    # bf16 MXU operands with f32 accumulation -> loosened tolerance
    np.testing.assert_allclose(np.asarray(out, np.float64), ref, atol=2e-2, rtol=2e-2)

    print("KERNEL_OK")
</pallas_src>

<mosaic_0001>
module attributes {stable_mosaic.version = 11 : i64} {
  func.func @_bilinear_kernel(%arg0: i32, %arg1: memref<1x8x24xbf16, #tpu.memory_space<vmem>>, %arg2: memref<1x6x16xbf16, #tpu.memory_space<vmem>>, %arg3: memref<128x24xbf16, #tpu.memory_space<vmem>>, %arg4: memref<128x1xf32, #tpu.memory_space<vmem>>, %arg5: memref<16x128xbf16, #tpu.memory_space<vmem>>, %arg6: memref<1x128xf32, #tpu.memory_space<vmem>>, %arg7: memref<128x128xbf16, #tpu.memory_space<vmem>>, %arg8: memref<1x6x128xf32, #tpu.memory_space<vmem>>, %arg9: memref<128x128xf32, #tpu.memory_space<vmem>>) attributes {dimension_semantics = [#tpu.dimension_semantics<parallel>], iteration_bounds = array<i64: 2>, scalar_prefetch = 0 : i64, scratch_operands = 1 : i64, tpu.core_type = #tpu.core_type<tc>, window_params = [{transform_indices = @transform_0, window_bounds = array<i64: 1, 8, 24>}, {transform_indices = @transform_1, window_bounds = array<i64: 1, 6, 16>}, {pipeline_mode = #tpu.pipeline_mode<synchronous>, transform_indices = @transform_2, window_bounds = array<i64: 128, 24>}, {pipeline_mode = #tpu.pipeline_mode<synchronous>, transform_indices = @transform_3, window_bounds = array<i64: 128, 1>}, {pipeline_mode = #tpu.pipeline_mode<synchronous>, transform_indices = @transform_4, window_bounds = array<i64: 16, 128>}, {pipeline_mode = #tpu.pipeline_mode<synchronous>, transform_indices = @transform_5, window_bounds = array<i64: 1, 128>}, {pipeline_mode = #tpu.pipeline_mode<synchronous>, transform_indices = @transform_6, window_bounds = array<i64: 128, 128>}, {transform_indices = @transform_7, window_bounds = array<i64: 1, 6, 128>}]} {
    %c0 = arith.constant 0 : index
    %c0_0 = arith.constant 0 : index
    %c0_1 = arith.constant 0 : index
    %0 = vector.load %arg1[%c0, %c0_0, %c0_1] : memref<1x8x24xbf16, #tpu.memory_space<vmem>>, vector<1x8x24xbf16>
    %1 = vector.shape_cast %0 : vector<1x8x24xbf16> to vector<8x24xbf16>
    %c0_2 = arith.constant 0 : index
    %c0_3 = arith.constant 0 : index
    %c0_4 = arith.constant 0 : index
    %2 = vector.load %arg2[%c0_2, %c0_3, %c0_4] : memref<1x6x16xbf16, #tpu.memory_space<vmem>>, vector<1x6x16xbf16>
    %3 = vector.shape_cast %2 : vector<1x6x16xbf16> to vector<6x16xbf16>
    %c0_5 = arith.constant 0 : index
    %c0_6 = arith.constant 0 : index
    %4 = vector.load %arg5[%c0_5, %c0_6] : memref<16x128xbf16, #tpu.memory_space<vmem>>, vector<16x128xbf16>
    %cst = arith.constant dense<0.000000e+00> : vector<6x128xf32>
    %5 = tpu.matmul %3, %4, %cst {dimension_numbers = #tpu.dot_dimension_numbers<[1], [0], [0], [1], [0, 0, 1, 1], [], []>} : vector<6x16xbf16>, vector<16x128xbf16>, vector<6x128xf32> -> vector<6x128xf32>
    %c0_7 = arith.constant 0 : index
    %c0_8 = arith.constant 0 : index
    %6 = vector.load %arg6[%c0_7, %c0_8] : memref<1x128xf32, #tpu.memory_space<vmem>>, vector<1x128xf32>
    %7 = vector.broadcast %6 : vector<1x128xf32> to vector<6x128xf32>
    %8 = arith.addf %5, %7 : vector<6x128xf32>
    %c0_9 = arith.constant 0 : index
    %c0_10 = arith.constant 0 : index
    %9 = vector.load %arg3[%c0_9, %c0_10] : memref<128x24xbf16, #tpu.memory_space<vmem>>, vector<128x24xbf16>
    %cst_11 = arith.constant dense<0.000000e+00> : vector<128x8xf32>
    %10 = tpu.matmul %9, %1, %cst_11 {dimension_numbers = #tpu.dot_dimension_numbers<[1], [1], [0], [0], [0, 0, 1, 0], [], []>} : vector<128x24xbf16>, vector<8x24xbf16>, vector<128x8xf32> -> vector<128x8xf32>
    %c0_12 = arith.constant 0 : index
    %c0_13 = arith.constant 0 : index
    %11 = vector.load %arg4[%c0_12, %c0_13] : memref<128x1xf32, #tpu.memory_space<vmem>>, vector<128x1xf32>
    %12 = vector.broadcast %11 : vector<128x1xf32> to vector<128x8xf32>
    %13 = arith.addf %10, %12 : vector<128x8xf32>
    %14 = arith.truncf %8 : vector<6x128xf32> to vector<6x128xbf16>
    %c0_14 = arith.constant 0 : index
    %c0_15 = arith.constant 0 : index
    %15 = vector.load %arg7[%c0_14, %c0_15] : memref<128x128xbf16, #tpu.memory_space<vmem>>, vector<128x128xbf16>
    %cst_16 = arith.constant dense<0.000000e+00> : vector<6x128xf32>
    %16 = tpu.matmul %14, %15, %cst_16 {dimension_numbers = #tpu.dot_dimension_numbers<[1], [0], [0], [1], [0, 0, 1, 1], [], []>} : vector<6x128xbf16>, vector<128x128xbf16>, vector<6x128xf32> -> vector<6x128xf32>
    %cst_17 = arith.constant 0.000000e+00 : f32
    %17 = vector.broadcast %cst_17 : f32 to vector<128x128xf32>
    %c0_18 = arith.constant 0 : index
    %c0_19 = arith.constant 0 : index
    %18 = vector.load %arg9[%c0_18, %c0_19] : memref<128x128xf32, #tpu.memory_space<vmem>>, vector<128x128xf32>
    tpu.vector_store %arg9[%c0_18, %c0_19], %17 {strides = array<i32>} : memref<128x128xf32, #tpu.memory_space<vmem>>, vector<128x128xf32>,
    %19 = vector.extract_strided_slice %13 {offsets = [0, 0], sizes = [32, 8], strides = [1, 1]} : vector<128x8xf32> to vector<32x8xf32>
    %c0_20 = arith.constant 0 : index
    %c0_21 = arith.constant 0 : index
    %20 = vector.load %arg9[%c0_20, %c0_21] : memref<128x128xf32, #tpu.memory_space<vmem>>, vector<32x8xf32>
    tpu.vector_store %arg9[%c0_20, %c0_21], %19 {strides = array<i32>} : memref<128x128xf32, #tpu.memory_space<vmem>>, vector<32x8xf32>,
    %c32 = arith.constant 32 : index
    %c8 = arith.constant 8 : index
    %21 = vector.load %arg9[%c32, %c8] : memref<128x128xf32, #tpu.memory_space<vmem>>, vector<32x8xf32>
    tpu.vector_store %arg9[%c32, %c8], %19 {strides = array<i32>} : memref<128x128xf32, #tpu.memory_space<vmem>>, vector<32x8xf32>,
    %c64 = arith.constant 64 : index
    %c16 = arith.constant 16 : index
    %22 = vector.load %arg9[%c64, %c16] : memref<128x128xf32, #tpu.memory_space<vmem>>, vector<32x8xf32>
    tpu.vector_store %arg9[%c64, %c16], %19 {strides = array<i32>} : memref<128x128xf32, #tpu.memory_space<vmem>>, vector<32x8xf32>,
    %c96 = arith.constant 96 : index
    %c24 = arith.constant 24 : index
    %23 = vector.load %arg9[%c96, %c24] : memref<128x128xf32, #tpu.memory_space<vmem>>, vector<32x8xf32>
    tpu.vector_store %arg9[%c96, %c24], %19 {strides = array<i32>} : memref<128x128xf32, #tpu.memory_space<vmem>>, vector<32x8xf32>,
    %24 = arith.truncf %16 : vector<6x128xf32> to vector<6x128xbf16>
    %c0_22 = arith.constant 0 : index
    %c0_23 = arith.constant 0 : index
    %25 = vector.load %arg9[%c0_22, %c0_23] : memref<128x128xf32, #tpu.memory_space<vmem>>, vector<128x128xf32>
    %26 = arith.truncf %25 : vector<128x128xf32> to vector<128x128xbf16>
    %cst_24 = arith.constant dense<0.000000e+00> : vector<6x128xf32>
    %27 = tpu.matmul %24, %26, %cst_24 {dimension_numbers = #tpu.dot_dimension_numbers<[1], [0], [0], [1], [0, 0, 1, 1], [], []>} : vector<6x128xbf16>, vector<128x128xbf16>, vector<6x128xf32> -> vector<6x128xf32>
    %c0_25 = arith.constant 0 : index
    %c0_26 = arith.constant 0 : index
    %c0_27 = arith.constant 0 : index
    %28 = vector.load %arg8[%c0_25, %c0_26, %c0_27] : memref<1x6x128xf32, #tpu.memory_space<vmem>>, vector<1x6x128xf32>
    %29 = vector.shape_cast %28 : vector<1x6x128xf32> to vector<6x128xf32>
    %30 = vector.shape_cast %27 : vector<6x128xf32> to vector<1x6x128xf32>
    tpu.vector_store %arg8[%c0_25, %c0_26, %c0_27], %30 {strides = array<i32>} : memref<1x6x128xf32, #tpu.memory_space<vmem>>, vector<1x6x128xf32>,
    return
  }
  func.func @transform_0(%arg0: i32) -> (i32, i32, i32) {
    %c0_i32 = arith.constant 0 : i32
    %c0_i32_0 = arith.constant 0 : i32
    %c0_i32_1 = arith.constant 0 : i32
    return %arg0, %c0_i32, %c0_i32_0 : i32, i32, i32
  }
  func.func @transform_1(%arg0: i32) -> (i32, i32, i32) {
    %c0_i32 = arith.constant 0 : i32
    %c0_i32_0 = arith.constant 0 : i32
    %c0_i32_1 = arith.constant 0 : i32
    return %arg0, %c0_i32, %c0_i32_0 : i32, i32, i32
  }
  func.func @transform_2(%arg0: i32) -> (i32, i32) {
    %c0_i32 = arith.constant 0 : i32
    %c0_i32_0 = arith.constant 0 : i32
    %c0_i32_1 = arith.constant 0 : i32
    return %c0_i32, %c0_i32_0 : i32, i32
  }
  func.func @transform_3(%arg0: i32) -> (i32, i32) {
    %c0_i32 = arith.constant 0 : i32
    %c0_i32_0 = arith.constant 0 : i32
    %c0_i32_1 = arith.constant 0 : i32
    return %c0_i32, %c0_i32_0 : i32, i32
  }
  func.func @transform_4(%arg0: i32) -> (i32, i32) {
    %c0_i32 = arith.constant 0 : i32
    %c0_i32_0 = arith.constant 0 : i32
    %c0_i32_1 = arith.constant 0 : i32
    return %c0_i32, %c0_i32_0 : i32, i32
  }
  func.func @transform_5(%arg0: i32) -> (i32, i32) {
    %c0_i32 = arith.constant 0 : i32
    %c0_i32_0 = arith.constant 0 : i32
    %c0_i32_1 = arith.constant 0 : i32
    return %c0_i32, %c0_i32_0 : i32, i32
  }
  func.func @transform_6(%arg0: i32) -> (i32, i32) {
    %c0_i32 = arith.constant 0 : i32
    %c0_i32_0 = arith.constant 0 : i32
    %c0_i32_1 = arith.constant 0 : i32
    return %c0_i32, %c0_i32_0 : i32, i32
  }
  func.func @transform_7(%arg0: i32) -> (i32, i32, i32) {
    %c0_i32 = arith.constant 0 : i32
    %c0_i32_0 = arith.constant 0 : i32
    %c0_i32_1 = arith.constant 0 : i32
    return %arg0, %c0_i32, %c0_i32_0 : i32, i32, i32
  }
}

</mosaic_0001>

<llo_original>
// kernel: tpu_custom_call.1
$region0: #{tpu_custom_call.1}
  #allocation0 [shape = 'u32[]', space=smem, size = 0x4, offset = 0x4, fixed_abs, tag = 'smem constant byte address 0x4 - core index']
  #allocation1 [shape = 'u32[72,128]{1,0:T(1,128)}', space=vmem, size = 0x9000, scoped, tag = 'internal scratch']
  #allocation2 [shape = 'f32[128,128]{1,0:T(8,128)}', space=vmem, size = 0x10000, scoped, tag = 'scratch operand']
  %s0 = inlined_call_operand.vmem [shape: bf16[2,8,24], index: 0, kind: input, shape index: {}]
  %s1 = inlined_call_operand.vmem [shape: bf16[2,6,16], index: 1, kind: input, shape index: {}]
  %s2 = inlined_call_operand.vmem [shape: bf16[128,24], index: 2, kind: input, shape index: {}]
  %s3 = inlined_call_operand.vmem [shape: f32[128,1], index: 3, kind: input, shape index: {}]
  %s4 = inlined_call_operand.vmem [shape: bf16[16,128], index: 4, kind: input, shape index: {}]
  %s5 = inlined_call_operand.vmem [shape: f32[1,128], index: 5, kind: input, shape index: {}]
  %s6 = inlined_call_operand.vmem [shape: bf16[128,128], index: 6, kind: input, shape index: {}]
  %s7 = inlined_call_operand.vmem [shape: f32[2,6,128], index: 7, kind: output, shape index: {}]
  %s8 = sld [smem:[#allocation0]]
  $region61: #{tpu_custom_call.1} parent=0
    _
  %s10 = ssub.s32 1, %s8
  %s11 = scalar_select 0, %s10, %s8
  loop: start=0, step=1, limit=4
  $region2: #{tpu_custom_call.1} parent=0 // loop_pre_header
    _
  $region3: #{tpu_custom_call.1} parent=0 // loop_header
    %s13 = sphi 0, %s17
    %p14 = scmp.ge.s32.totalorder %s13, 4
    %s23 = sphi 0, %s25
    %s26 = sphi 0, %s23
    %s27 = sphi 0, %s26
    %s43 = sphi 0, %s27
    %s49 = sphi 0, %s51
    %s52 = sphi 0, %s49
    %s53 = sphi 0, %s52
    %s69 = sphi 0, %s53
    %s73 = sphi 0, %s73
    %s75 = sphi 0, %s73
    %s76 = sphi 0, %s75
    %s90 = sphi 0, %s76
    %s94 = sphi 0, %s94
    %s96 = sphi 0, %s94
    %s97 = sphi 0, %s96
    %s111 = sphi 0, %s97
    %s115 = sphi 0, %s115
    %s117 = sphi 0, %s115
    %s118 = sphi 0, %s117
    %s132 = sphi 0, %s118
    %s136 = sphi 0, %s136
    %s138 = sphi 0, %s136
    %s139 = sphi 0, %s138
    %s153 = sphi 0, %s139
    %s157 = sphi 0, %s157
    %s159 = sphi 0, %s157
    %s160 = sphi 0, %s159
    %s174 = sphi 0, %s160
    %s180 = sphi 0, %s182
    %s183 = sphi 0, %s180
    %s184 = sphi 0, %s183
    %s200 = sphi 0, %s184
  $region4: #{tpu_custom_call.1} parent=0 // loop_header_branch
    %16 = sbr.rel (%p14) target = $region8
  $region5: #{tpu_custom_call.1} parent=0 // loop_body
    %s18 = ssub.s32 %s13, 1
    %s19 = ssub.s32 %s13, 2
    %s20 = sadd.s32 %s13, 1
    %s21 = ssub.s32 %s13, %s20
    %p22 = scmp.eq.s32.totalorder %s21, 0
    %s24 = sadd.s32 %s23, 1
    %s25 = scalar_select %p22, %s23, %s24
    %p28 = pneg %p22
    %p29 = scmp.eq.s32.totalorder %s13, 1
    %p30 = por %p28, %p29
    %p31 = scmp.ne.s32.totalorder %s23, %s26
    %p32 = scmp.eq.s32.totalorder %s13, 0
    %p33 = por %p31, %p32
    %p34 = scmp.ne.s32.totalorder %s23, %s26
    %p35 = scmp.eq.s32.totalorder %s18, 1
    %p36 = por %p34, %p35
    %p37 = scmp.ne.s32.totalorder %s26, %s27
    %p38 = scmp.eq.s32.totalorder %s18, 0
    %p39 = por %p37, %p38
    %p40 = scmp.ne.s32.totalorder %s26, %s27
    %p41 = scmp.eq.s32.totalorder %s19, 1
    %p42 = por %p40, %p41
    %p44 = scmp.ne.s32.totalorder %s27, %s43
    %p45 = scmp.eq.s32.totalorder %s19, 0
    %p46 = por %p44, %p45
    %s47 = ssub.s32 %s13, %s20
    %p48 = scmp.eq.s32.totalorder %s47, 0
    %s50 = sadd.s32 %s49, 1
    %s51 = scalar_select %p48, %s49, %s50
    %p54 = pneg %p48
    %p55 = scmp.eq.s32.totalorder %s13, 1
    %p56 = por %p54, %p55
    %p57 = scmp.ne.s32.totalorder %s49, %s52
    %p58 = scmp.eq.s32.totalorder %s13, 0
    %p59 = por %p57, %p58
    %p60 = scmp.ne.s32.totalorder %s49, %s52
    %p61 = scmp.eq.s32.totalorder %s18, 1
    %p62 = por %p60, %p61
    %p63 = scmp.ne.s32.totalorder %s52, %s53
    %p64 = scmp.eq.s32.totalorder %s18, 0
    %p65 = por %p63, %p64
    %p66 = scmp.ne.s32.totalorder %s52, %s53
    %p67 = scmp.eq.s32.totalorder %s19, 1
    %p68 = por %p66, %p67
    %p70 = scmp.ne.s32.totalorder %s53, %s69
    %p71 = scmp.eq.s32.totalorder %s19, 0
    %p72 = por %p70, %p71
    %s74 = sadd.s32 %s73, 1
    %p77 = scmp.eq.s32.totalorder %s13, 1
    %p78 = scmp.ne.s32.totalorder %s73, %s75
    %p79 = scmp.eq.s32.totalorder %s13, 0
    %p80 = por %p78, %p79
    %p81 = scmp.ne.s32.totalorder %s73, %s75
    %p82 = scmp.eq.s32.totalorder %s18, 1
    %p83 = por %p81, %p82
    %p84 = scmp.ne.s32.totalorder %s75, %s76
    %p85 = scmp.eq.s32.totalorder %s18, 0
    %p86 = por %p84, %p85
    %p87 = scmp.ne.s32.totalorder %s75, %s76
    %p88 = scmp.eq.s32.totalorder %s19, 1
    %p89 = por %p87, %p88
    %p91 = scmp.ne.s32.totalorder %s76, %s90
    %p92 = scmp.eq.s32.totalorder %s19, 0
    %p93 = por %p91, %p92
    %s95 = sadd.s32 %s94, 1
    %p98 = scmp.eq.s32.totalorder %s13, 1
    %p99 = scmp.ne.s32.totalorder %s94, %s96
    %p100 = scmp.eq.s32.totalorder %s13, 0
    %p101 = por %p99, %p100
    %p102 = scmp.ne.s32.totalorder %s94, %s96
    %p103 = scmp.eq.s32.totalorder %s18, 1
    %p104 = por %p102, %p103
    %p105 = scmp.ne.s32.totalorder %s96, %s97
    %p106 = scmp.eq.s32.totalorder %s18, 0
    %p107 = por %p105, %p106
    %p108 = scmp.ne.s32.totalorder %s96, %s97
    %p109 = scmp.eq.s32.totalorder %s19, 1
    %p110 = por %p108, %p109
    %p112 = scmp.ne.s32.totalorder %s97, %s111
    %p113 = scmp.eq.s32.totalorder %s19, 0
    %p114 = por %p112, %p113
    %s116 = sadd.s32 %s115, 1
    %p119 = scmp.eq.s32.totalorder %s13, 1
    %p120 = scmp.ne.s32.totalorder %s115, %s117
    %p121 = scmp.eq.s32.totalorder %s13, 0
    %p122 = por %p120, %p121
    %p123 = scmp.ne.s32.totalorder %s115, %s117
    %p124 = scmp.eq.s32.totalorder %s18, 1
    %p125 = por %p123, %p124
    %p126 = scmp.ne.s32.totalorder %s117, %s118
    %p127 = scmp.eq.s32.totalorder %s18, 0
    %p128 = por %p126, %p127
    %p129 = scmp.ne.s32.totalorder %s117, %s118
    %p130 = scmp.eq.s32.totalorder %s19, 1
    %p131 = por %p129, %p130
    %p133 = scmp.ne.s32.totalorder %s118, %s132
    %p134 = scmp.eq.s32.totalorder %s19, 0
    %p135 = por %p133, %p134
    %s137 = sadd.s32 %s136, 1
    %p140 = scmp.eq.s32.totalorder %s13, 1
    %p141 = scmp.ne.s32.totalorder %s136, %s138
    %p142 = scmp.eq.s32.totalorder %s13, 0
    %p143 = por %p141, %p142
    %p144 = scmp.ne.s32.totalorder %s136, %s138
    %p145 = scmp.eq.s32.totalorder %s18, 1
    %p146 = por %p144, %p145
    %p147 = scmp.ne.s32.totalorder %s138, %s139
    %p148 = scmp.eq.s32.totalorder %s18, 0
    %p149 = por %p147, %p148
    %p150 = scmp.ne.s32.totalorder %s138, %s139
    %p151 = scmp.eq.s32.totalorder %s19, 1
    %p152 = por %p150, %p151
    %p154 = scmp.ne.s32.totalorder %s139, %s153
    %p155 = scmp.eq.s32.totalorder %s19, 0
    %p156 = por %p154, %p155
    %s158 = sadd.s32 %s157, 1
    %p161 = scmp.eq.s32.totalorder %s13, 1
    %p162 = scmp.ne.s32.totalorder %s157, %s159
    %p163 = scmp.eq.s32.totalorder %s13, 0
    %p164 = por %p162, %p163
    %p165 = scmp.ne.s32.totalorder %s157, %s159
    %p166 = scmp.eq.s32.totalorder %s18, 1
    %p167 = por %p165, %p166
    %p168 = scmp.ne.s32.totalorder %s159, %s160
    %p169 = scmp.eq.s32.totalorder %s18, 0
    %p170 = por %p168, %p169
    %p171 = scmp.ne.s32.totalorder %s159, %s160
    %p172 = scmp.eq.s32.totalorder %s19, 1
    %p173 = por %p171, %p172
    %p175 = scmp.ne.s32.totalorder %s160, %s174
    %p176 = scmp.eq.s32.totalorder %s19, 0
    %p177 = por %p175, %p176
    %s178 = ssub.s32 %s13, %s20
    %p179 = scmp.eq.s32.totalorder %s178, 0
    %s181 = sadd.s32 %s180, 1
    %s182 = scalar_select %p179, %s180, %s181
    %p185 = pneg %p179
    %p186 = scmp.eq.s32.totalorder %s13, 1
    %p187 = por %p185, %p186
    %p188 = scmp.ne.s32.totalorder %s180, %s183
    %p189 = scmp.eq.s32.totalorder %s13, 0
    %p190 = por %p188, %p189
    %p191 = scmp.ne.s32.totalorder %s180, %s183
    %p192 = scmp.eq.s32.totalorder %s18, 1
    %p193 = por %p191, %p192
    %p194 = scmp.ne.s32.totalorder %s183, %s184
    %p195 = scmp.eq.s32.totalorder %s18, 0
    %p196 = por %p194, %p195
    %p197 = scmp.ne.s32.totalorder %s183, %s184
    %p198 = scmp.eq.s32.totalorder %s19, 1
    %p199 = por %p197, %p198
    %p201 = scmp.ne.s32.totalorder %s184, %s200
    %p202 = scmp.eq.s32.totalorder %s19, 0
    %p203 = por %p201, %p202
    %p204 = scmp.le.s32.totalorder 1, %s13
    %p205 = scmp.lt.s32.totalorder %s13, 3
    %p206 = pnand %p204, %p205
    %p207 = pneg %p206
    // Predicated region
    $region9: #{tpu_custom_call.1} parent=5 // pred_check
      _
    $region10: #{tpu_custom_call.1} parent=5 // pred_check_branch
      %209 = sbr.rel (%p206) target = $region12
    $region11: #{tpu_custom_call.1} parent=5 // pred_region
      %s210 = ssub.s32 %s13, 1
      // Predicated region
      $region13: #{tpu_custom_call.1} parent=11 // pred_check
        %p211 = pneg %p86
      $region14: #{tpu_custom_call.1} parent=11 // pred_check_branch
        %213 = sbr.rel (%p211) target = $region16
      $region15: #{tpu_custom_call.1} parent=11 // pred_region
        _
      $region16: #{tpu_custom_call.1} parent=11 // pred_fallthru
        _
      // Predicated region
      $region17: #{tpu_custom_call.1} parent=11 // pred_check
        %p214 = pneg %p107
      $region18: #{tpu_custom_call.1} parent=11 // pred_check_branch
        %216 = sbr.rel (%p214) target = $region20
      $region19: #{tpu_custom_call.1} parent=11 // pred_region
        _
      $region20: #{tpu_custom_call.1} parent=11 // pred_fallthru
        _
      // Predicated region
      $region21: #{tpu_custom_call.1} parent=11 // pred_check
        %p217 = pneg %p128
      $region22: #{tpu_custom_call.1} parent=11 // pred_check_branch
        %219 = sbr.rel (%p217) target = $region24
      $region23: #{tpu_custom_call.1} parent=11 // pred_region
        _
      $region24: #{tpu_custom_call.1} parent=11 // pred_fallthru
        _
      // Predicated region
      $region25: #{tpu_custom_call.1} parent=11 // pred_check
        %p220 = pneg %p149
      $region26: #{tpu_custom_call.1} parent=11 // pred_check_branch
        %222 = sbr.rel (%p220) target = $region28
      $region27: #{tpu_custom_call.1} parent=11 // pred_region
        _
      $region28: #{tpu_custom_call.1} parent=11 // pred_fallthru
        _
      // Predicated region
      $region29: #{tpu_custom_call.1} parent=11 // pred_check
        %p223 = pneg %p170
      $region30: #{tpu_custom_call.1} parent=11 // pred_check_branch
        %225 = sbr.rel (%p223) target = $region32
      $region31: #{tpu_custom_call.1} parent=11 // pred_region
        _
      $region32: #{tpu_custom_call.1} parent=11 // pred_fallthru
        _
    $region12: #{tpu_custom_call.1} parent=5 // pred_fallthru
      _
    %p226 = scmp.lt.s32.totalorder %s13, 2
    // Predicated region
    $region33: #{tpu_custom_call.1} parent=5 // pred_check
      %p227 = pneg %p226
    $region34: #{tpu_custom_call.1} parent=5 // pred_check_branch
      %229 = sbr.rel (%p227) target = $region36
    $region35: #{tpu_custom_call.1} parent=5 // pred_region
      // Predicated region
      $region37: #{tpu_custom_call.1} parent=35 // pred_check
        %p230 = pneg %p33
      $region38: #{tpu_custom_call.1} parent=35 // pred_check_branch
        %232 = sbr.rel (%p230) target = $region40
      $region39: #{tpu_custom_call.1} parent=35 // pred_region
        %p233 = scmp.lt.s32.totalorder %s13, 1
        %s234 = scalar_select %p233, %s13, 1
        %s235 = smul.addr %s234, 4
        %s236 = scalar_lea.vmem %s0, %s235
      $region40: #{tpu_custom_call.1} parent=35 // pred_fallthru
        _
      // Predicated region
      $region41: #{tpu_custom_call.1} parent=35 // pred_check
        %p237 = pneg %p59
      $region42: #{tpu_custom_call.1} parent=35 // pred_check_branch
        %239 = sbr.rel (%p237) target = $region44
      $region43: #{tpu_custom_call.1} parent=35 // pred_region
        %p240 = scmp.lt.s32.totalorder %s13, 1
        %s241 = scalar_select %p240, %s13, 1
        %s242 = smul.addr %s241, 4
        %s243 = scalar_lea.vmem %s1, %s242
      $region44: #{tpu_custom_call.1} parent=35 // pred_fallthru
        _
    $region36: #{tpu_custom_call.1} parent=5 // pred_fallthru
      _
    %p244 = scmp.le.s32.totalorder 1, %s13
    %p245 = scmp.lt.s32.totalorder %s13, 3
    %p246 = pnand %p244, %p245
    %p247 = pneg %p246
    // Predicated region
    $region45: #{tpu_custom_call.1} parent=5 // pred_check
      _
    $region46: #{tpu_custom_call.1} parent=5 // pred_check_branch
      %249 = sbr.rel (%p246) target = $region48
    $region47: #{tpu_custom_call.1} parent=5 // pred_region
      %s250 = ssub.s32 %s13, 1
      %p251 = scmp.lt.s32.totalorder %s18, 1
      %s252 = scalar_select %p251, %s18, 1
      %s253 = smul.addr %s252, 4
      %s254 = scalar_lea.vmem %s0, %s253
      %p255 = pneg %p39
      %p256 = pneg %p36
      %p257 = scmp.lt.s32.totalorder %s18, 1
      %s258 = scalar_select %p257, %s18, 1
      %s259 = smul.addr %s258, 4
      %s260 = scalar_lea.vmem %s1, %s259
      %p261 = pneg %p65
      %p262 = pneg %p62
      %p263 = pneg %p86
      %p264 = pneg %p83
      %p265 = pneg %p107
      %p266 = pneg %p104
      %p267 = pneg %p128
      %p268 = pneg %p125
      %p269 = pneg %p149
      %p270 = pneg %p146
      %p271 = pneg %p170
      %p272 = pneg %p167
      %p273 = pneg %p196
      %p274 = pneg %p193
      %p275 = scmp.lt.s32.totalorder %s18, 1
      %s276 = scalar_select %p275, %s18, 1
      %s277 = smul.addr %s276, 8
      %s278 = scalar_lea.vmem %s7, %s277
      %p279 = scmp.lt.s32.totalorder %s18, 1
      %s280 = scalar_select %p279, %s18, 1
      %s281 = smul.addr %s280, 4
      %s282 = scalar_lea.vmem %s0, %s281
      %p283 = scmp.lt.s32.totalorder %s18, 1
      %s284 = scalar_select %p283, %s18, 1
      %s285 = smul.addr %s284, 4
      %s286 = scalar_lea.vmem %s1, %s285
      %p287 = scmp.lt.s32.totalorder %s18, 1
      %s288 = scalar_select %p287, %s18, 1
      %s289 = smul.addr %s288, 8
      %s290 = scalar_lea.vmem %s7, %s289
      %v292 = vld [vmem:[%s282] sm:$0xf]
      %v293 = vld [vmem:[%s286] sm:$0x7]
      %v294 = vld [vmem:[%s4] sm:$0xf]
      %v295 = vld [vmem:[%s4 + $0x4] sm:$0xf]
      %v296 = vld [vmem:[%s5] sm:$0x1]
      %v298 = vperm.slane %v296, 0
      %v302 = vunpack.c.l.b16 %v294
      %v303 = vunpack.c.l.b16 %v295
      %v304 = vpack.c.b16 %v303, %v302
      %vm306 = vcmask 130048
      %v308 = vsel %vm306, %v293, 0
      %310 = vmatpush.bf16.msra.mxu0 0
      %311 = vmatpush.bf16.msra.mxu0 0
      %312 = vmatpush.bf16.msra.mxu0 0
      %313 = vmatpush.bf16.msra.mxu0 0
      %314 = vmatpush.bf16.msra.mxu0 0
      %315 = vmatpush.bf16.msra.mxu0 0
      %316 = vmatpush.bf16.msra.mxu0 0
      %317 = vmatpush.bf16.msra.mxu0 %v304
      %318 = vmatmul.bf16.gmra.mxu0 %v308
      %v319 = vpop.f32.mrf.mxu0
      %v320 = vadd.f32 %v298, %v319
      %v321 = vpop.f32.mrf.mxu0
      %322 = vdwg.mxu0
      %v323 = vld [vmem:[%s2] sm:$0xf]
      %v324 = vld [vmem:[%s2 + $0x4] sm:$0xf]
      %v325 = vld [vmem:[%s2 + $0x8] sm:$0xf]
      %v326 = vld [vmem:[%s2 + $0xc] sm:$0xf]
      %v327 = vld [vmem:[%s2 + $0x10] sm:$0xf]
      %v328 = vld [vmem:[%s2 + $0x14] sm:$0xf]
      %v329 = vld [vmem:[%s2 + $0x18] sm:$0xf]
      %v330 = vld [vmem:[%s2 + $0x1c] sm:$0xf]
      %v331 = vld [vmem:[%s2 + $0x20] sm:$0xf]
      %v332 = vld [vmem:[%s2 + $0x24] sm:$0xf]
      %v333 = vld [vmem:[%s2 + $0x28] sm:$0xf]
      %v334 = vld [vmem:[%s2 + $0x2c] sm:$0xf]
      %v335 = vld [vmem:[%s2 + $0x30] sm:$0xf]
      %v336 = vld [vmem:[%s2 + $0x34] sm:$0xf]
      %v337 = vld [vmem:[%s2 + $0x38] sm:$0xf]
      %v338 = vld [vmem:[%s2 + $0x3c] sm:$0xf]
      %v339 = vld [vmem:[%s3] sm:$0xff]
      %v340 = vld [vmem:[%s3 + $0x8] sm:$0xff]
      %v341 = vld [vmem:[%s3 + $0x10] sm:$0xff]
      %v342 = vld [vmem:[%s3 + $0x18] sm:$0xff]
      %v343 = vld [vmem:[%s3 + $0x20] sm:$0xff]
      %v344 = vld [vmem:[%s3 + $0x28] sm:$0xff]
      %v345 = vld [vmem:[%s3 + $0x30] sm:$0xff]
      %v346 = vld [vmem:[%s3 + $0x38] sm:$0xff]
      %v347 = vld [vmem:[%s3 + $0x40] sm:$0xff]
      %v348 = vld [vmem:[%s3 + $0x48] sm:$0xff]
      %v349 = vld [vmem:[%s3 + $0x50] sm:$0xff]
      %v350 = vld [vmem:[%s3 + $0x58] sm:$0xff]
      %v351 = vld [vmem:[%s3 + $0x60] sm:$0xff]
      %v352 = vld [vmem:[%s3 + $0x68] sm:$0xff]
      %v353 = vld [vmem:[%s3 + $0x70] sm:$0xff]
      %v354 = vld [vmem:[%s3 + $0x78] sm:$0xff]
      %356 = vset.pattern.permute.xlu0 0
      %357 = vperm.xlu0 %356, %v339
      %v358 = vpop.permute.xlu0 %357
      %361 = vset.pattern.permute.xlu0 0
      %362 = vperm.xlu0 %361, %v340
      %v363 = vpop.permute.xlu0 %362
      %366 = vset.pattern.permute.xlu0 0
      %367 = vperm.xlu0 %366, %v341
      %v368 = vpop.permute.xlu0 %367
      %371 = vset.pattern.permute.xlu0 0
      %372 = vperm.xlu0 %371, %v342
      %v373 = vpop.permute.xlu0 %372
      %376 = vset.pattern.permute.xlu0 0
      %377 = vperm.xlu0 %376, %v343
      %v378 = vpop.permute.xlu0 %377
      %380 = vset.pattern.permute.xlu0 0
      %381 = vperm.xlu0 %380, %v344
      %v382 = vpop.permute.xlu0 %381
      %384 = vset.pattern.permute.xlu0 0
      %385 = vperm.xlu0 %384, %v345
      %v386 = vpop.permute.xlu0 %385
      %388 = vset.pattern.permute.xlu0 0
      %389 = vperm.xlu0 %388, %v346
      %v390 = vpop.permute.xlu0 %389
      %392 = vset.pattern.permute.xlu0 0
      %393 = vperm.xlu0 %392, %v347
      %v394 = vpop.permute.xlu0 %393
      %396 = vset.pattern.permute.xlu0 0
      %397 = vperm.xlu0 %396, %v348
      %v398 = vpop.permute.xlu0 %397
      %400 = vset.pattern.permute.xlu0 0
      %401 = vperm.xlu0 %400, %v349
      %v402 = vpop.permute.xlu0 %401
      %404 = vset.pattern.permute.xlu0 0
      %405 = vperm.xlu0 %404, %v350
      %v406 = vpop.permute.xlu0 %405
      %408 = vset.pattern.permute.xlu0 0
      %409 = vperm.xlu0 %408, %v351
      %v410 = vpop.permute.xlu0 %409
      %412 = vset.pattern.permute.xlu0 0
      %413 = vperm.xlu0 %412, %v352
      %v414 = vpop.permute.xlu0 %413
      %416 = vset.pattern.permute.xlu0 0
      %417 = vperm.xlu0 %416, %v353
      %v418 = vpop.permute.xlu0 %417
      %420 = vset.pattern.permute.xlu0 0
      %421 = vperm.xlu0 %420, %v354
      %v422 = vpop.permute.xlu0 %421
      %v439 = vunpack.c.l.b16 %v323
      %v440 = vunpack.c.l.b16 %v324
      %v441 = vunpack.c.l.b16 %v325
      %v442 = vunpack.c.l.b16 %v326
      %v443 = vunpack.c.l.b16 %v327
      %v444 = vunpack.c.l.b16 %v328
      %v445 = vunpack.c.l.b16 %v329
      %v446 = vunpack.c.l.b16 %v330
      %v447 = vunpack.c.l.b16 %v331
      %v448 = vunpack.c.l.b16 %v332
      %v449 = vunpack.c.l.b16 %v333
      %v450 = vunpack.c.l.b16 %v334
      %v451 = vunpack.c.l.b16 %v335
      %v452 = vunpack.c.l.b16 %v336
      %v453 = vunpack.c.l.b16 %v337
      %v454 = vunpack.c.l.b16 %v338
      %v455 = vpack.c.b16 %v440, %v439
      %v456 = vpack.c.b16 %v442, %v441
      %v457 = vpack.c.b16 %v444, %v443
      %v458 = vpack.c.b16 %v446, %v445
      %v459 = vpack.c.b16 %v448, %v447
      %v460 = vpack.c.b16 %v450, %v449
      %v461 = vpack.c.b16 %v452, %v451
      %v462 = vpack.c.b16 %v454, %v453
      %vm463 = vcmask 195584
      %v465 = vsel %vm463, %v455, 0
      %v468 = vsel %vm463, %v456, 0
      %v471 = vsel %vm463, %v457, 0
      %v474 = vsel %vm463, %v458, 0
      %v477 = vsel %vm463, %v459, 0
      %v480 = vsel %vm463, %v460, 0
      %v483 = vsel %vm463, %v461, 0
      %v486 = vsel %vm463, %v462, 0
      %v489 = vsel %vm463, %v292, 0
      %491 = vmatpush.bf16.xpose.msra.mxu0 0
      %492 = vmatpush.bf16.xpose.msra.mxu0 0
      %493 = vmatpush.bf16.xpose.msra.mxu0 0
      %494 = vmatpush.bf16.xpose.msra.mxu0 0
      %495 = vmatpush.bf16.xpose.msra.mxu0 0
      %496 = vmatpush.bf16.xpose.msra.mxu0 0
      %497 = vmatpush.bf16.xpose.msra.mxu0 0
      %498 = vmatpush.bf16.xpose.msra.mxu0 %v489
      %499 = vmatmul.bf16.gmra.mxu0 %v465
      %v500 = vpop.f32.mrf.mxu0
      %v501 = vadd.f32 %v358, %v500
      %v502 = vpop.f32.mrf.mxu0
      %v503 = vadd.f32 %v363, %v502
      %504 = vmatmul.bf16.gmra.mxu0 %v468
      %v505 = vpop.f32.mrf.mxu0
      %v506 = vadd.f32 %v368, %v505
      %v507 = vpop.f32.mrf.mxu0
      %v508 = vadd.f32 %v373, %v507
      %509 = vmatmul.bf16.gmra.mxu0 %v471
      %v510 = vpop.f32.mrf.mxu0
      %v511 = vpop.f32.mrf.mxu0
      %512 = vmatmul.bf16.gmra.mxu0 %v474
      %v513 = vpop.f32.mrf.mxu0
      %v514 = vpop.f32.mrf.mxu0
      %515 = vmatmul.bf16.gmra.mxu0 %v477
      %v516 = vpop.f32.mrf.mxu0
      %v517 = vpop.f32.mrf.mxu0
      %518 = vmatmul.bf16.gmra.mxu0 %v480
      %v519 = vpop.f32.mrf.mxu0
      %v520 = vpop.f32.mrf.mxu0
      %521 = vmatmul.bf16.gmra.mxu0 %v483
      %v522 = vpop.f32.mrf.mxu0
      %v523 = vpop.f32.mrf.mxu0
      %524 = vmatmul.bf16.gmra.mxu0 %v486
      %v525 = vpop.f32.mrf.mxu0
      %v526 = vpop.f32.mrf.mxu0
      %527 = vdwg.mxu0
      %v528 = vpack.c.bf16 %v320, %v320
      %v529 = vld [vmem:[%s6] sm:$0xf]
      %v530 = vld [vmem:[%s6 + $0x4] sm:$0xf]
      %v531 = vld [vmem:[%s6 + $0x8] sm:$0xf]
      %v532 = vld [vmem:[%s6 + $0xc] sm:$0xf]
      %v533 = vld [vmem:[%s6 + $0x10] sm:$0xf]
      %v534 = vld [vmem:[%s6 + $0x14] sm:$0xf]
      %v535 = vld [vmem:[%s6 + $0x18] sm:$0xf]
      %v536 = vld [vmem:[%s6 + $0x1c] sm:$0xf]
      %v537 = vld [vmem:[%s6 + $0x20] sm:$0xf]
      %v538 = vld [vmem:[%s6 + $0x24] sm:$0xf]
      %v539 = vld [vmem:[%s6 + $0x28] sm:$0xf]
      %v540 = vld [vmem:[%s6 + $0x2c] sm:$0xf]
      %v541 = vld [vmem:[%s6 + $0x30] sm:$0xf]
      %v542 = vld [vmem:[%s6 + $0x34] sm:$0xf]
      %v543 = vld [vmem:[%s6 + $0x38] sm:$0xf]
      %v544 = vld [vmem:[%s6 + $0x3c] sm:$0xf]
      %v561 = vunpack.c.l.b16 %v529
      %v562 = vunpack.c.l.b16 %v530
      %v563 = vunpack.c.l.b16 %v531
      %v564 = vunpack.c.l.b16 %v532
      %v565 = vunpack.c.l.b16 %v533
      %v566 = vunpack.c.l.b16 %v534
      %v567 = vunpack.c.l.b16 %v535
      %v568 = vunpack.c.l.b16 %v536
      %v569 = vunpack.c.l.b16 %v537
      %v570 = vunpack.c.l.b16 %v538
      %v571 = vunpack.c.l.b16 %v539
      %v572 = vunpack.c.l.b16 %v540
      %v573 = vunpack.c.l.b16 %v541
      %v574 = vunpack.c.l.b16 %v542
      %v575 = vunpack.c.l.b16 %v543
      %v576 = vunpack.c.l.b16 %v544
      %v577 = vpack.c.b16 %v562, %v561
      %v578 = vpack.c.b16 %v564, %v563
      %v579 = vpack.c.b16 %v566, %v565
      %v580 = vpack.c.b16 %v568, %v567
      %v581 = vpack.c.b16 %v570, %v569
      %v582 = vpack.c.b16 %v572, %v571
      %v583 = vpack.c.b16 %v574, %v573
      %v584 = vpack.c.b16 %v576, %v575
      %593 = vmatpush.bf16.msra.mxu0 %v584
      %594 = vmatpush.bf16.msra.mxu0 %v583
      %595 = vmatpush.bf16.msra.mxu0 %v582
      %596 = vmatpush.bf16.msra.mxu0 %v581
      %597 = vmatpush.bf16.msra.mxu0 %v580
      %598 = vmatpush.bf16.msra.mxu0 %v579
      %599 = vmatpush.bf16.msra.mxu0 %v578
      %600 = vmatpush.bf16.msra.mxu0 %v577
      %601 = vmatmul.bf16.gmra.mxu0 %v528
      %v602 = vpop.f32.mrf.mxu0
      %v603 = vadd.f32 0.0, %v602
      %v604 = vpop.f32.mrf.mxu0
      %605 = vdwg.mxu0
      %606 = vst [vmem:[#allocation2] sm:$0xff] 0.0
      %607 = vst [vmem:[#allocation2 + $0x8] sm:$0xff] 0.0
      %608 = vst [vmem:[#allocation2 + $0x10] sm:$0xff] 0.0
      %609 = vst [vmem:[#allocation2 + $0x18] sm:$0xff] 0.0
      %610 = vst [vmem:[#allocation2 + $0x20] sm:$0xff] 0.0
      %611 = vst [vmem:[#allocation2 + $0x28] sm:$0xff] 0.0
      %612 = vst [vmem:[#allocation2 + $0x30] sm:$0xff] 0.0
      %613 = vst [vmem:[#allocation2 + $0x38] sm:$0xff] 0.0
      %614 = vst [vmem:[#allocation2 + $0x40] sm:$0xff] 0.0
      %615 = vst [vmem:[#allocation2 + $0x48] sm:$0xff] 0.0
      %616 = vst [vmem:[#allocation2 + $0x50] sm:$0xff] 0.0
      %617 = vst [vmem:[#allocation2 + $0x58] sm:$0xff] 0.0
      %618 = vst [vmem:[#allocation2 + $0x60] sm:$0xff] 0.0
      %619 = vst [vmem:[#allocation2 + $0x68] sm:$0xff] 0.0
      %620 = vst [vmem:[#allocation2 + $0x70] sm:$0xff] 0.0
      %621 = vst [vmem:[#allocation2 + $0x78] sm:$0xff] 0.0
      %vm622 = vcmask 64512
      %623 = vst.msk [vmem:[#allocation2] sm:$0xff] %vm622, %v501
      %624 = vst.msk [vmem:[#allocation2 + $0x8] sm:$0xff] %vm622, %v503
      %625 = vst.msk [vmem:[#allocation2 + $0x10] sm:$0xff] %vm622, %v506
      %626 = vst.msk [vmem:[#allocation2 + $0x18] sm:$0xff] %vm622, %v508
      %631 = vrot.lane.b32.xlu0 %v501, 8
      %v632 = vpop.permute.xlu0 %631
      %633 = vrot.lane.b32.xlu0 %v503, 8
      %v634 = vpop.permute.xlu0 %633
      %635 = vrot.lane.b32.xlu0 %v506, 8
      %v636 = vpop.permute.xlu0 %635
      %637 = vrot.lane.b32.xlu0 %v508, 8
      %v638 = vpop.permute.xlu0 %637
      %vm643 = vcmask 130112
      %644 = vst.msk [vmem:[#allocation2 + $0x20] sm:$0xff] %vm643, %v632
      %645 = vst.msk [vmem:[#allocation2 + $0x28] sm:$0xff] %vm643, %v634
      %646 = vst.msk [vmem:[#allocation2 + $0x30] sm:$0xff] %vm643, %v636
      %647 = vst.msk [vmem:[#allocation2 + $0x38] sm:$0xff] %vm643, %v638
      %648 = vrot.lane.b32.xlu0 %v501, 16
      %v649 = vpop.permute.xlu0 %648
      %650 = vrot.lane.b32.xlu0 %v503, 16
      %v651 = vpop.permute.xlu0 %650
      %652 = vrot.lane.b32.xlu0 %v506, 16
      %v653 = vpop.permute.xlu0 %652
      %654 = vrot.lane.b32.xlu0 %v508, 16
      %v655 = vpop.permute.xlu0 %654
      %vm660 = vcmask 195712
      %661 = vst.msk [vmem:[#allocation2 + $0x40] sm:$0xff] %vm660, %v649
      %662 = vst.msk [vmem:[#allocation2 + $0x48] sm:$0xff] %vm660, %v651
      %663 = vst.msk [vmem:[#allocation2 + $0x50] sm:$0xff] %vm660, %v653
      %664 = vst.msk [vmem:[#allocation2 + $0x58] sm:$0xff] %vm660, %v655
      %665 = vrot.lane.b32.xlu0 %v501, 24
      %v666 = vpop.permute.xlu0 %665
      %667 = vrot.lane.b32.xlu0 %v503, 24
      %v668 = vpop.permute.xlu0 %667
      %669 = vrot.lane.b32.xlu0 %v506, 24
      %v670 = vpop.permute.xlu0 %669
      %671 = vrot.lane.b32.xlu0 %v508, 24
      %v672 = vpop.permute.xlu0 %671
      %vm677 = vcmask 261312
      %678 = vst.msk [vmem:[#allocation2 + $0x60] sm:$0xff] %vm677, %v666
      %679 = vst.msk [vmem:[#allocation2 + $0x68] sm:$0xff] %vm677, %v668
      %680 = vst.msk [vmem:[#allocation2 + $0x70] sm:$0xff] %vm677, %v670
      %681 = vst.msk [vmem:[#allocation2 + $0x78] sm:$0xff] %vm677, %v672
      %v682 = vpack.c.bf16 %v603, %v603
      %v683 = vld [vmem:[#allocation2] sm:$0xff]
      %v684 = vld [vmem:[#allocation2 + $0x8] sm:$0xff]
      %v685 = vld [vmem:[#allocation2 + $0x10] sm:$0xff]
      %v686 = vld [vmem:[#allocation2 + $0x18] sm:$0xff]
      %v687 = vld [vmem:[#allocation2 + $0x20] sm:$0xff]
      %v688 = vld [vmem:[#allocation2 + $0x28] sm:$0xff]
      %v689 = vld [vmem:[#allocation2 + $0x30] sm:$0xff]
      %v690 = vld [vmem:[#allocation2 + $0x38] sm:$0xff]
      %v691 = vld [vmem:[#allocation2 + $0x40] sm:$0xff]
      %v692 = vld [vmem:[#allocation2 + $0x48] sm:$0xff]
      %v693 = vld [vmem:[#allocation2 + $0x50] sm:$0xff]
      %v694 = vld [vmem:[#allocation2 + $0x58] sm:$0xff]
      %v695 = vld [vmem:[#allocation2 + $0x60] sm:$0xff]
      %v696 = vld [vmem:[#allocation2 + $0x68] sm:$0xff]
      %v697 = vld [vmem:[#allocation2 + $0x70] sm:$0xff]
      %v698 = vld [vmem:[#allocation2 + $0x78] sm:$0xff]
      %v699 = vpack.c.bf16 %v684, %v683
      %v700 = vpack.c.bf16 %v686, %v685
      %v701 = vpack.c.bf16 %v688, %v687
      %v702 = vpack.c.bf16 %v690, %v689
      %v703 = vpack.c.bf16 %v692, %v691
      %v704 = vpack.c.bf16 %v694, %v693
      %v705 = vpack.c.bf16 %v696, %v695
      %v706 = vpack.c.bf16 %v698, %v697
      %707 = vmatpush.bf16.msra.mxu0 %v706
      %708 = vmatpush.bf16.msra.mxu0 %v705
      %709 = vmatpush.bf16.msra.mxu0 %v704
      %710 = vmatpush.bf16.msra.mxu0 %v703
      %711 = vmatpush.bf16.msra.mxu0 %v702
      %712 = vmatpush.bf16.msra.mxu0 %v701
      %713 = vmatpush.bf16.msra.mxu0 %v700
      %714 = vmatpush.bf16.msra.mxu0 %v699
      %715 = vmatmul.bf16.gmra.mxu0 %v682
      %v716 = vpop.f32.mrf.mxu0
      %v717 = vadd.f32 0.0, %v716
      %v718 = vpop.f32.mrf.mxu0
      %719 = vdwg.mxu0
      %720 = vst [vmem:[%s290] sm:$0x3f] %v717
      %p721 = scmp.lt.s32.totalorder %s18, 1
      %s722 = scalar_select %p721, %s18, 1
      %s723 = smul.addr %s722, 8
      %s724 = scalar_lea.vmem %s7, %s723
      // Predicated region
      $region49: #{tpu_custom_call.1} parent=47 // pred_check
        %p725 = pneg %p193
      $region50: #{tpu_custom_call.1} parent=47 // pred_check_branch
        %727 = sbr.rel (%p725) target = $region52
      $region51: #{tpu_custom_call.1} parent=47 // pred_region
        _
      $region52: #{tpu_custom_call.1} parent=47 // pred_fallthru
        _
    $region48: #{tpu_custom_call.1} parent=5 // pred_fallthru
      _
    %p728 = scmp.le.s32.totalorder 2, %s13
    // Predicated region
    $region53: #{tpu_custom_call.1} parent=5 // pred_check
      %p729 = pneg %p728
    $region54: #{tpu_custom_call.1} parent=5 // pred_check_branch
      %731 = sbr.rel (%p729) target = $region56
    $region55: #{tpu_custom_call.1} parent=5 // pred_region
      %s732 = ssub.s32 %s13, 2
      // Predicated region
      $region57: #{tpu_custom_call.1} parent=55 // pred_check
        %p733 = pneg %p199
      $region58: #{tpu_custom_call.1} parent=55 // pred_check_branch
        %735 = sbr.rel (%p733) target = $region60
      $region59: #{tpu_custom_call.1} parent=55 // pred_region
        %p736 = scmp.lt.s32.totalorder %s19, 1
        %s737 = scalar_select %p736, %s19, 1
        %s738 = smul.addr %s737, 8
        %s739 = scalar_lea.vmem %s7, %s738
      $region60: #{tpu_custom_call.1} parent=55 // pred_fallthru
        _
    $region56: #{tpu_custom_call.1} parent=5 // pred_fallthru
      _
  $region6: #{tpu_custom_call.1} parent=0 // loop_footer
    %s17 = sadd.s32 1, %s13
  $region7: #{tpu_custom_call.1} parent=0 // loop_footer_branch
    %12 = sbr.rel target = $region3
  $region8: #{tpu_custom_call.1} parent=0 // loop_exit
    _

</llo_original>
